<compile_context>
chip_gen: v7x
topology: tpu7x:2x2x1
jax: 0.10.0
libtpu: 0.0.40
codegen_flags: <defaults>
</compile_context>

<pallas_src>
import functools

import jax
import jax.numpy as jnp
from jax.experimental import pallas as pl
from jax.experimental.pallas import tpu as pltpu


def _savg_cls_tavg_kernel(x_ref, w_ref, b_ref, o_ref, *, inv_pool):
    # x_ref : (bn, T, C, hw)  raw features for bn videos (T segments each)
    # w_ref : (C, K_pad)      FC weight, transposed + zero-padded to lane-dense K
    # b_ref : (1, K_pad)      FC bias, zero-padded
    # o_ref : (bn, K_pad)     per-video logits averaged over segments
    # TODO(synk): training-mode dropout (random mask + 1/(1-p) scale) is not
    #             implemented; inference-mode dropout is the identity.
    t_seg = x_ref.shape[1]
    acc = x_ref[:, 0, :, :].astype(jnp.float32)               # (bn, C, hw)
    for t in range(1, t_seg):                                  # segment sum (VPU)
        acc = acc + x_ref[:, t, :, :].astype(jnp.float32)
    pooled = jnp.sum(acc, axis=-1) * inv_pool                  # (bn, C), XLU reduce
    out = jnp.dot(pooled, w_ref[...],
                  preferred_element_type=jnp.float32) + b_ref[...]   # (bn, K_pad)
    o_ref[...] = out.astype(o_ref.dtype)


def make_savg_drop_cls_tavg(weight, bias, *, num_segments, num_features,
                            block_videos=None,
                            target_block_bytes=8 * 1024 * 1024):
    """Build the Pallas TPU forward of SavgDropClsTavg (inference; dropout=id).

    weight: (K, C) FC weight, bias: (K,).  The returned fwd(x) maps
    x: (nt, C*h*h) with nt = n_videos * num_segments  ->  (n_videos, K).
    Padded weight/bias are precomputed once here (hoisted off the call path).
    """
    K, C = weight.shape
    assert C == num_features, "fc in_features must equal num_features"
    T = int(num_segments)
    k_pad = max(128, pl.cdiv(K, 128) * 128)
    wp = jnp.pad(weight.T.astype(jnp.float32), ((0, 0), (0, k_pad - K)))
    bp = jnp.pad(bias.reshape(1, K).astype(jnp.float32), ((0, 0), (0, k_pad - K)))

    def fwd(x):
        nt, chw = x.shape
        hw = chw // C
        assert C * hw == chw, "chw must equal num_features * h * h"
        assert nt % T == 0, "nt must be a multiple of num_segments"
        n = nt // T

        # --- videos per grid step: multiple of 8 (sublane-aligned output
        #     block), ~target_block_bytes of streamed x per step, and >= 2
        #     grid steps when possible so v7x's two TensorCores both get work.
        itemsize = x.dtype.itemsize
        per_video = T * chw * itemsize
        if block_videos is not None:
            bn = pl.cdiv(int(block_videos), 8) * 8
        else:
            bn = max(8, (target_block_bytes // max(1, per_video)) // 8 * 8)
            bn = min(bn, pl.cdiv(pl.cdiv(n, 2), 8) * 8)      # keep grid >= 2
        if bn >= n:
            bn = n                                           # one full-extent block
        grid = (pl.cdiv(n, bn),)

        # Free metadata reshape (contiguous) — no HBM copy, no in-kernel reshape.
        x4 = x.reshape(n, T, C, hw)

        kernel = functools.partial(_savg_cls_tavg_kernel,
                                   inv_pool=1.0 / float(T * hw))
        cost = pl.CostEstimate(
            flops=int(nt * chw + 2 * n * C * k_pad),
            transcendentals=0,
            bytes_accessed=int(nt * chw * itemsize + (C + 1) * k_pad * 4
                               + n * k_pad * itemsize),
        )

        out = pl.pallas_call(
            kernel,
            out_shape=jax.ShapeDtypeStruct((n, k_pad), x.dtype),
            grid_spec=pltpu.PrefetchScalarGridSpec(
                num_scalar_prefetch=0,
                grid=grid,
                in_specs=[
                    # streamed x slab: bn videos, one contiguous DMA per step
                    pl.BlockSpec((bn, T, C, hw), lambda i: (i, 0, 0, 0)),
                    # tiny resident operands (constant index_map)
                    pl.BlockSpec((C, k_pad), lambda i: (0, 0)),
                    pl.BlockSpec((1, k_pad), lambda i: (0, 0)),
                ],
                out_specs=pl.BlockSpec((bn, k_pad), lambda i: (i, 0)),
            ),
            compiler_params=pltpu.CompilerParams(
                dimension_semantics=("parallel",),    # megacore-shardable (v7x)
                vmem_limit_bytes=48 * 1024 * 1024,    # < 64 MiB physical (v7x)
            ),
            cost_estimate=cost,
        )(x4, wp, bp)
        return out if k_pad == K else out[:, :K]

    return fwd


def _reference(x, weight, bias, *, num_segments, num_features):
    nt, chw = x.shape
    C = num_features
    hw = chw // C
    pooled = x.reshape(nt, C, hw).mean(axis=-1)              # (nt, C)
    logits = pooled @ weight.T + bias                        # (nt, K)
    return logits.reshape(-1, num_segments, weight.shape[0]).mean(axis=1)


if __name__ == "__main__":
    key = jax.random.PRNGKey(0)

    # Small, forward-consistent shapes.
    num_features = 8      # C
    h = 16                # spatial side
    num_segments = 4      # T
    n_videos = 16         # batch of videos
    num_classes = 16      # K (< 128 -> exercises the lane-padding path)

    nt = n_videos * num_segments
    chw = num_features * h * h

    kx, kw, kb = jax.random.split(key, 3)
    x = jax.random.normal(kx, (nt, chw), dtype=jnp.float32)
    bound = (1.0 / num_features) ** 0.5
    weight = jax.random.uniform(kw, (num_classes, num_features),
                                minval=-bound, maxval=bound, dtype=jnp.float32)
    bias = jax.random.uniform(kb, (num_classes,),
                              minval=-bound, maxval=bound, dtype=jnp.float32)

    fwd = make_savg_drop_cls_tavg(weight, bias,
                                  num_segments=num_segments,
                                  num_features=num_features)

    # 1) Even batch: auto block size -> bn=8, grid=(2,) (both v7x TCs busy).
    out = jax.block_until_ready(fwd(x))
    ref = _reference(x, weight, bias,
                     num_segments=num_segments, num_features=num_features)
    assert out.shape == (n_videos, num_classes)
    assert jnp.allclose(out, ref, atol=2e-4, rtol=1e-3), \
        float(jnp.max(jnp.abs(out - ref)))

    # 2) Ragged batch with n % bn != 0: no HBM pad copy — the uneven boundary
    #    block is handled by masked boundary reads/writes (per-video
    #    independence keeps garbage out of the kept rows).
    n2 = 13
    x2 = x[: n2 * num_segments]
    out2 = jax.block_until_ready(fwd(x2))
    ref2 = _reference(x2, weight, bias,
                      num_segments=num_segments, num_features=num_features)
    assert out2.shape == (n2, num_classes)
    assert jnp.allclose(out2, ref2, atol=2e-4, rtol=1e-3), \
        float(jnp.max(jnp.abs(out2 - ref2)))

    # 3) Tiny batch (n <= 8): single full-extent block.
    n3 = 5
    x3 = x[: n3 * num_segments]
    out3 = jax.block_until_ready(fwd(x3))
    ref3 = _reference(x3, weight, bias,
                      num_segments=num_segments, num_features=num_features)
    assert out3.shape == (n3, num_classes)
    assert jnp.allclose(out3, ref3, atol=2e-4, rtol=1e-3), \
        float(jnp.max(jnp.abs(out3 - ref3)))

    print("KERNEL_OK")
</pallas_src>

<mosaic_0001>
module attributes {stable_mosaic.version = 11 : i64} {
  func.func @_savg_cls_tavg_kernel(%arg0: i32, %arg1: memref<8x4x8x256xf32, #tpu.memory_space<vmem>>, %arg2: memref<8x128xf32, #tpu.memory_space<vmem>>, %arg3: memref<1x128xf32, #tpu.memory_space<vmem>>, %arg4: memref<8x128xf32, #tpu.memory_space<vmem>>) attributes {dimension_semantics = [#tpu.dimension_semantics<parallel>], iteration_bounds = array<i64: 2>, scalar_prefetch = 0 : i64, scratch_operands = 0 : i64, tpu.core_type = #tpu.core_type<tc>, window_params = [{transform_indices = @transform_0, window_bounds = array<i64: 8, 4, 8, 256>}, {pipeline_mode = #tpu.pipeline_mode<synchronous>, transform_indices = @transform_1, window_bounds = array<i64: 8, 128>}, {pipeline_mode = #tpu.pipeline_mode<synchronous>, transform_indices = @transform_2, window_bounds = array<i64: 1, 128>}, {transform_indices = @transform_3, window_bounds = array<i64: 8, 128>}]} {
    %c0 = arith.constant 0 : index
    %c0_0 = arith.constant 0 : index
    %c0_1 = arith.constant 0 : index
    %c0_2 = arith.constant 0 : index
    %0 = vector.load %arg1[%c0, %c0_0, %c0_1, %c0_2] : memref<8x4x8x256xf32, #tpu.memory_space<vmem>>, vector<8x1x8x256xf32>
    %1 = vector.shape_cast %0 : vector<8x1x8x256xf32> to vector<8x8x256xf32>
    %c0_3 = arith.constant 0 : index
    %c1 = arith.constant 1 : index
    %c0_4 = arith.constant 0 : index
    %c0_5 = arith.constant 0 : index
    %2 = vector.load %arg1[%c0_3, %c1, %c0_4, %c0_5] : memref<8x4x8x256xf32, #tpu.memory_space<vmem>>, vector<8x1x8x256xf32>
    %3 = vector.shape_cast %2 : vector<8x1x8x256xf32> to vector<8x8x256xf32>
    %4 = arith.addf %1, %3 : vector<8x8x256xf32>
    %c0_6 = arith.constant 0 : index
    %c2 = arith.constant 2 : index
    %c0_7 = arith.constant 0 : index
    %c0_8 = arith.constant 0 : index
    %5 = vector.load %arg1[%c0_6, %c2, %c0_7, %c0_8] : memref<8x4x8x256xf32, #tpu.memory_space<vmem>>, vector<8x1x8x256xf32>
    %6 = vector.shape_cast %5 : vector<8x1x8x256xf32> to vector<8x8x256xf32>
    %7 = arith.addf %4, %6 : vector<8x8x256xf32>
    %c0_9 = arith.constant 0 : index
    %c3 = arith.constant 3 : index
    %c0_10 = arith.constant 0 : index
    %c0_11 = arith.constant 0 : index
    %8 = vector.load %arg1[%c0_9, %c3, %c0_10, %c0_11] : memref<8x4x8x256xf32, #tpu.memory_space<vmem>>, vector<8x1x8x256xf32>
    %9 = vector.shape_cast %8 : vector<8x1x8x256xf32> to vector<8x8x256xf32>
    %10 = arith.addf %7, %9 : vector<8x8x256xf32>
    %cst = arith.constant dense<0.000000e+00> : vector<8x8xf32>
    %11 = vector.multi_reduction <add>, %10, %cst [2] : vector<8x8x256xf32> to vector<8x8xf32>
    %cst_12 = arith.constant 9.765625E-4 : f32
    %12 = vector.broadcast %cst_12 : f32 to vector<8x8xf32>
    %13 = arith.mulf %11, %12 : vector<8x8xf32>
    %c0_13 = arith.constant 0 : index
    %c0_14 = arith.constant 0 : index
    %14 = vector.load %arg2[%c0_13, %c0_14] : memref<8x128xf32, #tpu.memory_space<vmem>>, vector<8x128xf32>
    %cst_15 = arith.constant dense<0.000000e+00> : vector<8x128xf32>
    %15 = tpu.matmul %13, %14, %cst_15 {dimension_numbers = #tpu.dot_dimension_numbers<[1], [0], [0], [1], [0, 0, 1, 1], [], []>} : vector<8x8xf32>, vector<8x128xf32>, vector<8x128xf32> -> vector<8x128xf32>
    %c0_16 = arith.constant 0 : index
    %c0_17 = arith.constant 0 : index
    %16 = vector.load %arg3[%c0_16, %c0_17] : memref<1x128xf32, #tpu.memory_space<vmem>>, vector<1x128xf32>
    %17 = vector.broadcast %16 : vector<1x128xf32> to vector<8x128xf32>
    %18 = arith.addf %15, %17 : vector<8x128xf32>
    %c0_18 = arith.constant 0 : index
    %c0_19 = arith.constant 0 : index
    %19 = vector.load %arg4[%c0_18, %c0_19] : memref<8x128xf32, #tpu.memory_space<vmem>>, vector<8x128xf32>
    tpu.vector_store %arg4[%c0_18, %c0_19], %18 {strides = array<i32>} : memref<8x128xf32, #tpu.memory_space<vmem>>, vector<8x128xf32>,
    return
  }
  func.func @transform_0(%arg0: i32) -> (i32, i32, i32, i32) {
    %c0_i32 = arith.constant 0 : i32
    %c0_i32_0 = arith.constant 0 : i32
    %c0_i32_1 = arith.constant 0 : i32
    %c0_i32_2 = arith.constant 0 : i32
    return %arg0, %c0_i32, %c0_i32_0, %c0_i32_1 : i32, i32, i32, i32
  }
  func.func @transform_1(%arg0: i32) -> (i32, i32) {
    %c0_i32 = arith.constant 0 : i32
    %c0_i32_0 = arith.constant 0 : i32
    %c0_i32_1 = arith.constant 0 : i32
    return %c0_i32, %c0_i32_0 : i32, i32
  }
  func.func @transform_2(%arg0: i32) -> (i32, i32) {
    %c0_i32 = arith.constant 0 : i32
    %c0_i32_0 = arith.constant 0 : i32
    %c0_i32_1 = arith.constant 0 : i32
    return %c0_i32, %c0_i32_0 : i32, i32
  }
  func.func @transform_3(%arg0: i32) -> (i32, i32) {
    %c0_i32 = arith.constant 0 : i32
    %c0_i32_0 = arith.constant 0 : i32
    return %arg0, %c0_i32 : i32, i32
  }
}

</mosaic_0001>

<llo_original>
// kernel: tpu_custom_call.1
$region0: #{tpu_custom_call.1}
  #allocation0 [shape = 'u32[]', space=smem, size = 0x4, offset = 0x4, fixed_abs, tag = 'smem constant byte address 0x4 - core index']
  #allocation1 [shape = 'u32[144,128]{1,0:T(1,128)}', space=vmem, size = 0x12000, scoped, tag = 'internal scratch']
  %s0 = inlined_call_operand.hbm [shape: f32[16,4,8,256], index: 0, kind: input, shape index: {}]
  %s1 = inlined_call_operand.hbm [shape: f32[8,128], index: 1, kind: input, shape index: {}]
  %s2 = inlined_call_operand.vmem [shape: f32[1,128], index: 2, kind: input, shape index: {}]
  %s3 = inlined_call_operand.hbm [shape: f32[16,128], index: 3, kind: output, shape index: {}]
  %s4 = sld [smem:[#allocation0]]
  $region53: #{tpu_custom_call.1} parent=0
    _
  %s6 = ssub.s32 1, %s4
  %s7 = scalar_select 0, %s6, %s4
  $region1: #{tpu_custom_call.1} parent=0
    #allocation2 [shape = 'u8[524288]{0}', space=vmem, size = 0x80000, scoped, tag = 'input window, operand 0']
    #allocation3 [shape = 's32[2]{0}', space=sflag, size = 0x8, scoped, tag = 'scoped memory for tpu_custom_call.1']
    #allocation4 [shape = 's32[2]{0}', space=sflag, size = 0x8, scoped, tag = 'scoped memory for tpu_custom_call.1']
    #allocation5 [shape = 'u8[4096]{0}', space=vmem, size = 0x1000, scoped, tag = 'input window, operand 1, single buffered']
    #allocation6 [shape = 's32[1]{0}', space=sflag, size = 0x4, scoped, tag = 'scoped memory for tpu_custom_call.1']
    #allocation7 [shape = 'u8[8192]{0}', space=vmem, size = 0x2000, scoped, tag = 'output window, operand 0']
    %8 = vsyncpa [#allocation3], 0
    %s9 = scalar_lea.sflag [#allocation3], 1
    %10 = vsyncpa %s9, 0
    %11 = vsyncpa [#allocation6], 0
    %12 = vsyncpa [#allocation4], 0
    %s13 = scalar_lea.sflag [#allocation4], 1
    %14 = vsyncpa %s13, 0
    loop: start=0, step=1, limit=4
    $region2: #{tpu_custom_call.1} parent=1 // loop_pre_header
      _
    $region3: #{tpu_custom_call.1} parent=1 // loop_header
      %s16 = sphi 0, %s20
      %p17 = scmp.ge.s32.totalorder %s16, 4
      %s26 = sphi 0, %s28
      %s29 = sphi 0, %s26
      %s30 = sphi 0, %s29
      %s46 = sphi 0, %s30
      %s50 = sphi 0, %s50
      %s52 = sphi 0, %s50
      %s53 = sphi 0, %s52
      %s67 = sphi 0, %s53
      %s71 = sphi 0, %s71
      %s73 = sphi 0, %s71
      %s74 = sphi 0, %s73
      %s88 = sphi 0, %s74
      %s94 = sphi 0, %s96
      %s97 = sphi 0, %s94
      %s98 = sphi 0, %s97
      %s114 = sphi 0, %s98
    $region4: #{tpu_custom_call.1} parent=1 // loop_header_branch
      %19 = sbr.rel (%p17) target = $region8
    $region5: #{tpu_custom_call.1} parent=1 // loop_body
      %s21 = ssub.s32 %s16, 1
      %s22 = ssub.s32 %s16, 2
      %s23 = sadd.s32 %s16, 1
      %s24 = ssub.s32 %s16, %s23
      %p25 = scmp.eq.s32.totalorder %s24, 0
      %s27 = sadd.s32 %s26, 1
      %s28 = scalar_select %p25, %s26, %s27
      %p31 = pneg %p25
      %p32 = scmp.eq.s32.totalorder %s16, 1
      %p33 = por %p31, %p32
      %p34 = scmp.ne.s32.totalorder %s26, %s29
      %p35 = scmp.eq.s32.totalorder %s16, 0
      %p36 = por %p34, %p35
      %p37 = scmp.ne.s32.totalorder %s26, %s29
      %p38 = scmp.eq.s32.totalorder %s21, 1
      %p39 = por %p37, %p38
      %p40 = scmp.ne.s32.totalorder %s29, %s30
      %p41 = scmp.eq.s32.totalorder %s21, 0
      %p42 = por %p40, %p41
      %p43 = scmp.ne.s32.totalorder %s29, %s30
      %p44 = scmp.eq.s32.totalorder %s22, 1
      %p45 = por %p43, %p44
      %p47 = scmp.ne.s32.totalorder %s30, %s46
      %p48 = scmp.eq.s32.totalorder %s22, 0
      %p49 = por %p47, %p48
      %s51 = sadd.s32 %s50, 1
      %p54 = scmp.eq.s32.totalorder %s16, 1
      %p55 = scmp.ne.s32.totalorder %s50, %s52
      %p56 = scmp.eq.s32.totalorder %s16, 0
      %p57 = por %p55, %p56
      %p58 = scmp.ne.s32.totalorder %s50, %s52
      %p59 = scmp.eq.s32.totalorder %s21, 1
      %p60 = por %p58, %p59
      %p61 = scmp.ne.s32.totalorder %s52, %s53
      %p62 = scmp.eq.s32.totalorder %s21, 0
      %p63 = por %p61, %p62
      %p64 = scmp.ne.s32.totalorder %s52, %s53
      %p65 = scmp.eq.s32.totalorder %s22, 1
      %p66 = por %p64, %p65
      %p68 = scmp.ne.s32.totalorder %s53, %s67
      %p69 = scmp.eq.s32.totalorder %s22, 0
      %p70 = por %p68, %p69
      %s72 = sadd.s32 %s71, 1
      %p75 = scmp.eq.s32.totalorder %s16, 1
      %p76 = scmp.ne.s32.totalorder %s71, %s73
      %p77 = scmp.eq.s32.totalorder %s16, 0
      %p78 = por %p76, %p77
      %p79 = scmp.ne.s32.totalorder %s71, %s73
      %p80 = scmp.eq.s32.totalorder %s21, 1
      %p81 = por %p79, %p80
      %p82 = scmp.ne.s32.totalorder %s73, %s74
      %p83 = scmp.eq.s32.totalorder %s21, 0
      %p84 = por %p82, %p83
      %p85 = scmp.ne.s32.totalorder %s73, %s74
      %p86 = scmp.eq.s32.totalorder %s22, 1
      %p87 = por %p85, %p86
      %p89 = scmp.ne.s32.totalorder %s74, %s88
      %p90 = scmp.eq.s32.totalorder %s22, 0
      %p91 = por %p89, %p90
      %s92 = ssub.s32 %s16, %s23
      %p93 = scmp.eq.s32.totalorder %s92, 0
      %s95 = sadd.s32 %s94, 1
      %s96 = scalar_select %p93, %s94, %s95
      %p99 = pneg %p93
      %p100 = scmp.eq.s32.totalorder %s16, 1
      %p101 = por %p99, %p100
      %p102 = scmp.ne.s32.totalorder %s94, %s97
      %p103 = scmp.eq.s32.totalorder %s16, 0
      %p104 = por %p102, %p103
      %p105 = scmp.ne.s32.totalorder %s94, %s97
      %p106 = scmp.eq.s32.totalorder %s21, 1
      %p107 = por %p105, %p106
      %p108 = scmp.ne.s32.totalorder %s97, %s98
      %p109 = scmp.eq.s32.totalorder %s21, 0
      %p110 = por %p108, %p109
      %p111 = scmp.ne.s32.totalorder %s97, %s98
      %p112 = scmp.eq.s32.totalorder %s22, 1
      %p113 = por %p111, %p112
      %p115 = scmp.ne.s32.totalorder %s98, %s114
      %p116 = scmp.eq.s32.totalorder %s22, 0
      %p117 = por %p115, %p116
      %p118 = scmp.le.s32.totalorder 1, %s16
      %p119 = scmp.lt.s32.totalorder %s16, 3
      %p120 = pnand %p118, %p119
      %p121 = pneg %p120
      // Predicated region
      $region9: #{tpu_custom_call.1} parent=5 // pred_check
        _
      $region10: #{tpu_custom_call.1} parent=5 // pred_check_branch
        %123 = sbr.rel (%p120) target = $region12
      $region11: #{tpu_custom_call.1} parent=5 // pred_region
        %s124 = ssub.s32 %s16, 1
        // Predicated region
        $region13: #{tpu_custom_call.1} parent=11 // pred_check
          %p125 = pneg %p63
        $region14: #{tpu_custom_call.1} parent=11 // pred_check_branch
          %127 = sbr.rel (%p125) target = $region16
        $region15: #{tpu_custom_call.1} parent=11 // pred_region
          %s129 = ssub.s32 128, 128
          %130 = vsyncadd [#allocation6], %s129
          %s132 = sshll.u32 [#allocation5], 4
          %s133 = int_to_ptr.vmem [resolvable:$true] %s132
          %135 = dma.hbm_to_vmem [thread:$0]  %s1, 128, %s133, [#allocation6]
        $region16: #{tpu_custom_call.1} parent=11 // pred_fallthru
          _
        // Predicated region
        $region17: #{tpu_custom_call.1} parent=11 // pred_check
          %p136 = pneg %p84
        $region18: #{tpu_custom_call.1} parent=11 // pred_check_branch
          %138 = sbr.rel (%p136) target = $region20
        $region19: #{tpu_custom_call.1} parent=11 // pred_region
          _
        $region20: #{tpu_custom_call.1} parent=11 // pred_fallthru
          _
      $region12: #{tpu_custom_call.1} parent=5 // pred_fallthru
        _
      %p139 = scmp.lt.s32.totalorder %s16, 2
      // Predicated region
      $region21: #{tpu_custom_call.1} parent=5 // pred_check
        %p140 = pneg %p139
      $region22: #{tpu_custom_call.1} parent=5 // pred_check_branch
        %142 = sbr.rel (%p140) target = $region24
      $region23: #{tpu_custom_call.1} parent=5 // pred_region
        // Predicated region
        $region25: #{tpu_custom_call.1} parent=23 // pred_check
          %p143 = pneg %p36
        $region26: #{tpu_custom_call.1} parent=23 // pred_check_branch
          %145 = sbr.rel (%p143) target = $region28
        $region27: #{tpu_custom_call.1} parent=23 // pred_region
          %s146 = sand.u32 %s26, 1
          %s147 = scalar_lea.sflag [#allocation3], %s146
          %s148 = sand.u32 %s26, 1
          %s149 = smul.addr %s148, 512
          %s150 = scalar_lea.vmem [#allocation2], %s149
          %s151 = smul.u32 8, %s16
          %s153 = ssub.s32 8192, 8192
          %154 = vsyncadd %s147, %s153
          %s155 = smul.addr %s151, 8
          %s156 = smul.addr %s155, 128
          %s157 = scalar_lea.hbm %s0, %s156
          %s158 = sshll.u32 %s150, 4
          %s159 = int_to_ptr.vmem [resolvable:$true] %s158
          %164 = dma.hbm_to_vmem [thread:$0]  %s157, 8192, %s159, %s147, 256, 256, 16
        $region28: #{tpu_custom_call.1} parent=23 // pred_fallthru
          _
      $region24: #{tpu_custom_call.1} parent=5 // pred_fallthru
        _
      %p165 = scmp.le.s32.totalorder 1, %s16
      %p166 = scmp.lt.s32.totalorder %s16, 3
      %p167 = pnand %p165, %p166
      %p168 = pneg %p167
      // Predicated region
      $region29: #{tpu_custom_call.1} parent=5 // pred_check
        _
      $region30: #{tpu_custom_call.1} parent=5 // pred_check_branch
        %170 = sbr.rel (%p167) target = $region32
      $region31: #{tpu_custom_call.1} parent=5 // pred_region
        %s171 = ssub.s32 %s16, 1
        %s172 = sand.u32 %s29, 1
        %s173 = scalar_lea.sflag [#allocation3], %s172
        %s174 = sand.u32 %s29, 1
        %s175 = smul.addr %s174, 512
        %s176 = scalar_lea.vmem [#allocation2], %s175
        // Predicated region
        $region33: #{tpu_custom_call.1} parent=31 // pred_check
          %p177 = pneg %p42
        $region34: #{tpu_custom_call.1} parent=31 // pred_check_branch
          %179 = sbr.rel (%p177) target = $region36
        $region35: #{tpu_custom_call.1} parent=31 // pred_region
          %180 = dma.done %s173, 8192
        $region36: #{tpu_custom_call.1} parent=31 // pred_fallthru
          _
        // Predicated region
        $region37: #{tpu_custom_call.1} parent=31 // pred_check
          %p181 = pneg %p63
        $region38: #{tpu_custom_call.1} parent=31 // pred_check_branch
          %183 = sbr.rel (%p181) target = $region40
        $region39: #{tpu_custom_call.1} parent=31 // pred_region
          %184 = dma.done [#allocation6], 128
        $region40: #{tpu_custom_call.1} parent=31 // pred_fallthru
          _
        %s185 = sand.u32 %s29, 1
        %s186 = scalar_lea.sflag [#allocation3], %s185
        %s187 = sand.u32 %s29, 1
        %s188 = smul.addr %s187, 512
        %s189 = scalar_lea.vmem [#allocation2], %s188
        %p190 = pneg %p42
        %p191 = pneg %p39
        %p192 = pneg %p63
        %p193 = pneg %p60
        %p194 = pneg %p84
        %p195 = pneg %p81
        %p196 = pneg %p110
        %p197 = pneg %p107
        %s198 = sand.u32 %s97, 1
        %s199 = scalar_lea.sflag [#allocation4], %s198
        %s200 = sand.u32 %s97, 1
        %s201 = smul.addr %s200, 8
        %s202 = scalar_lea.vmem [#allocation7], %s201
        %s203 = smul.u32 8, %s21
        %v204 = vld [vmem:[%s176] sm:$0xff]
        %v205 = vld [vmem:[%s176 + $0x8] sm:$0xff]
        %v206 = vld [vmem:[%s176 + $0x40] sm:$0xff]
        %v207 = vld [vmem:[%s176 + $0x48] sm:$0xff]
        %v208 = vld [vmem:[%s176 + $0x80] sm:$0xff]
        %v209 = vld [vmem:[%s176 + $0x88] sm:$0xff]
        %v210 = vld [vmem:[%s176 + $0xc0] sm:$0xff]
        %v211 = vld [vmem:[%s176 + $0xc8] sm:$0xff]
        %v212 = vld [vmem:[%s176 + $0x100] sm:$0xff]
        %v213 = vld [vmem:[%s176 + $0x108] sm:$0xff]
        %v214 = vld [vmem:[%s176 + $0x140] sm:$0xff]
        %v215 = vld [vmem:[%s176 + $0x148] sm:$0xff]
        %v216 = vld [vmem:[%s176 + $0x180] sm:$0xff]
        %v217 = vld [vmem:[%s176 + $0x188] sm:$0xff]
        %v218 = vld [vmem:[%s176 + $0x1c0] sm:$0xff]
        %v219 = vld [vmem:[%s176 + $0x1c8] sm:$0xff]
        %s220 = scalar_lea.vmem %s176, 16 [#allocation2]
        %v221 = vld [vmem:[%s220] sm:$0xff]
        %v222 = vld [vmem:[%s220 + $0x8] sm:$0xff]
        %v223 = vld [vmem:[%s220 + $0x40] sm:$0xff]
        %v224 = vld [vmem:[%s220 + $0x48] sm:$0xff]
        %v225 = vld [vmem:[%s220 + $0x80] sm:$0xff]
        %v226 = vld [vmem:[%s220 + $0x88] sm:$0xff]
        %v227 = vld [vmem:[%s220 + $0xc0] sm:$0xff]
        %v228 = vld [vmem:[%s220 + $0xc8] sm:$0xff]
        %v229 = vld [vmem:[%s220 + $0x100] sm:$0xff]
        %v230 = vld [vmem:[%s220 + $0x108] sm:$0xff]
        %v231 = vld [vmem:[%s220 + $0x140] sm:$0xff]
        %v232 = vld [vmem:[%s220 + $0x148] sm:$0xff]
        %v233 = vld [vmem:[%s220 + $0x180] sm:$0xff]
        %v234 = vld [vmem:[%s220 + $0x188] sm:$0xff]
        %v235 = vld [vmem:[%s220 + $0x1c0] sm:$0xff]
        %v236 = vld [vmem:[%s220 + $0x1c8] sm:$0xff]
        %v237 = vadd.f32 %v204, %v221
        %v238 = vadd.f32 %v205, %v222
        %v239 = vadd.f32 %v206, %v223
        %v240 = vadd.f32 %v207, %v224
        %v241 = vadd.f32 %v208, %v225
        %v242 = vadd.f32 %v209, %v226
        %v243 = vadd.f32 %v210, %v227
        %v244 = vadd.f32 %v211, %v228
        %v245 = vadd.f32 %v212, %v229
        %v246 = vadd.f32 %v213, %v230
        %v247 = vadd.f32 %v214, %v231
        %v248 = vadd.f32 %v215, %v232
        %v249 = vadd.f32 %v216, %v233
        %v250 = vadd.f32 %v217, %v234
        %v251 = vadd.f32 %v218, %v235
        %v252 = vadd.f32 %v219, %v236
        %s253 = scalar_lea.vmem %s176, 32 [#allocation2]
        %v254 = vld [vmem:[%s253] sm:$0xff]
        %v255 = vld [vmem:[%s253 + $0x8] sm:$0xff]
        %v256 = vld [vmem:[%s253 + $0x40] sm:$0xff]
        %v257 = vld [vmem:[%s253 + $0x48] sm:$0xff]
        %v258 = vld [vmem:[%s253 + $0x80] sm:$0xff]
        %v259 = vld [vmem:[%s253 + $0x88] sm:$0xff]
        %v260 = vld [vmem:[%s253 + $0xc0] sm:$0xff]
        %v261 = vld [vmem:[%s253 + $0xc8] sm:$0xff]
        %v262 = vld [vmem:[%s253 + $0x100] sm:$0xff]
        %v263 = vld [vmem:[%s253 + $0x108] sm:$0xff]
        %v264 = vld [vmem:[%s253 + $0x140] sm:$0xff]
        %v265 = vld [vmem:[%s253 + $0x148] sm:$0xff]
        %v266 = vld [vmem:[%s253 + $0x180] sm:$0xff]
        %v267 = vld [vmem:[%s253 + $0x188] sm:$0xff]
        %v268 = vld [vmem:[%s253 + $0x1c0] sm:$0xff]
        %v269 = vld [vmem:[%s253 + $0x1c8] sm:$0xff]
        %v270 = vadd.f32 %v237, %v254
        %v271 = vadd.f32 %v238, %v255
        %v272 = vadd.f32 %v239, %v256
        %v273 = vadd.f32 %v240, %v257
        %v274 = vadd.f32 %v241, %v258
        %v275 = vadd.f32 %v242, %v259
        %v276 = vadd.f32 %v243, %v260
        %v277 = vadd.f32 %v244, %v261
        %v278 = vadd.f32 %v245, %v262
        %v279 = vadd.f32 %v246, %v263
        %v280 = vadd.f32 %v247, %v264
        %v281 = vadd.f32 %v248, %v265
        %v282 = vadd.f32 %v249, %v266
        %v283 = vadd.f32 %v250, %v267
        %v284 = vadd.f32 %v251, %v268
        %v285 = vadd.f32 %v252, %v269
        %s286 = scalar_lea.vmem %s176, 48 [#allocation2]
        %v287 = vld [vmem:[%s286] sm:$0xff]
        %v288 = vld [vmem:[%s286 + $0x8] sm:$0xff]
        %v289 = vld [vmem:[%s286 + $0x40] sm:$0xff]
        %v290 = vld [vmem:[%s286 + $0x48] sm:$0xff]
        %v291 = vld [vmem:[%s286 + $0x80] sm:$0xff]
        %v292 = vld [vmem:[%s286 + $0x88] sm:$0xff]
        %v293 = vld [vmem:[%s286 + $0xc0] sm:$0xff]
        %v294 = vld [vmem:[%s286 + $0xc8] sm:$0xff]
        %v295 = vld [vmem:[%s286 + $0x100] sm:$0xff]
        %v296 = vld [vmem:[%s286 + $0x108] sm:$0xff]
        %v297 = vld [vmem:[%s286 + $0x140] sm:$0xff]
        %v298 = vld [vmem:[%s286 + $0x148] sm:$0xff]
        %v299 = vld [vmem:[%s286 + $0x180] sm:$0xff]
        %v300 = vld [vmem:[%s286 + $0x188] sm:$0xff]
        %v301 = vld [vmem:[%s286 + $0x1c0] sm:$0xff]
        %v302 = vld [vmem:[%s286 + $0x1c8] sm:$0xff]
        %v303 = vadd.f32 %v270, %v287
        %v304 = vadd.f32 %v271, %v288
        %v305 = vadd.f32 %v272, %v289
        %v306 = vadd.f32 %v273, %v290
        %v307 = vadd.f32 %v274, %v291
        %v308 = vadd.f32 %v275, %v292
        %v309 = vadd.f32 %v276, %v293
        %v310 = vadd.f32 %v277, %v294
        %v311 = vadd.f32 %v278, %v295
        %v312 = vadd.f32 %v279, %v296
        %v313 = vadd.f32 %v280, %v297
        %v314 = vadd.f32 %v281, %v298
        %v315 = vadd.f32 %v282, %v299
        %v316 = vadd.f32 %v283, %v300
        %v317 = vadd.f32 %v284, %v301
        %v318 = vadd.f32 %v285, %v302
        %v319 = vadd.f32 %v303, %v304
        %320 = vadd.xlane.f32.xlu0 %v319
        %v321 = vpop.xlane.xlu0 %320
        %v322 = vadd.f32 %v305, %v306
        %323 = vadd.xlane.f32.xlu0 %v322
        %v324 = vpop.xlane.xlu0 %323
        %v325 = vadd.f32 %v307, %v308
        %326 = vadd.xlane.f32.xlu0 %v325
        %v327 = vpop.xlane.xlu0 %326
        %v328 = vadd.f32 %v309, %v310
        %329 = vadd.xlane.f32.xlu0 %v328
        %v330 = vpop.xlane.xlu0 %329
        %v331 = vadd.f32 %v311, %v312
        %332 = vadd.xlane.f32.xlu0 %v331
        %v333 = vpop.xlane.xlu0 %332
        %v334 = vadd.f32 %v313, %v314
        %335 = vadd.xlane.f32.xlu0 %v334
        %v336 = vpop.xlane.xlu0 %335
        %v337 = vadd.f32 %v315, %v316
        %338 = vadd.xlane.f32.xlu0 %v337
        %v339 = vpop.xlane.xlu0 %338
        %v340 = vadd.f32 %v317, %v318
        %341 = vadd.xlane.f32.xlu0 %v340
        %v342 = vpop.xlane.xlu0 %341
        %v343 = vmul.f32 %v321, 0.0009765625
        %v344 = vmul.f32 %v324, 0.0009765625
        %v345 = vmul.f32 %v327, 0.0009765625
        %v346 = vmul.f32 %v330, 0.0009765625
        %v347 = vmul.f32 %v333, 0.0009765625
        %v348 = vmul.f32 %v336, 0.0009765625
        %v349 = vmul.f32 %v339, 0.0009765625
        %v350 = vmul.f32 %v342, 0.0009765625
        %v351 = vld [vmem:[#allocation5] sm:$0xff]
        %v352 = vld [vmem:[%s2] sm:$0x1]
        %v354 = vlaneseq
        %v355 = vshrl.u32 %v354, 7
        %v356 = vsub.s32 0, %v355
        %v357 = vrot.slane %v352, %v356
        %v367 = vlaneseq
        %v368 = vand.u32 %v367, 127
        %v369 = vlaneseq
        %v370 = vshrl.u32 %v369, 7
        %v371 = vsub.s32 %v368, %v370
        %v372 = vrot.slane %v343, %v371
        %v373 = vlaneseq
        %v374 = vshrl.u32 %v373, 7
        %v375 = vsub.s32 %v368, %v374
        %v376 = vrot.slane %v344, %v375
        %v377 = vlaneseq
        %v378 = vshrl.u32 %v377, 7
        %v379 = vsub.s32 %v368, %v378
        %v380 = vrot.slane %v345, %v379
        %v381 = vlaneseq
        %v382 = vshrl.u32 %v381, 7
        %v383 = vsub.s32 %v368, %v382
        %v384 = vrot.slane %v346, %v383
        %v385 = vlaneseq
        %v386 = vshrl.u32 %v385, 7
        %v387 = vsub.s32 %v368, %v386
        %v388 = vrot.slane %v347, %v387
        %v389 = vlaneseq
        %v390 = vshrl.u32 %v389, 7
        %v391 = vsub.s32 %v368, %v390
        %v392 = vrot.slane %v348, %v391
        %v393 = vlaneseq
        %v394 = vshrl.u32 %v393, 7
        %v395 = vsub.s32 %v368, %v394
        %v396 = vrot.slane %v349, %v395
        %v397 = vlaneseq
        %v398 = vshrl.u32 %v397, 7
        %v399 = vsub.s32 %v368, %v398
        %v400 = vrot.slane %v350, %v399
        %vm401 = vcmask 1041409
        %v402 = vsel %vm401, %v376, %v372
        %vm403 = vcmask 1042434
        %v404 = vsel %vm403, %v380, %v402
        %vm405 = vcmask 1043459
        %v406 = vsel %vm405, %v384, %v404
        %vm407 = vcmask 1044484
        %v408 = vsel %vm407, %v388, %v406
        %vm409 = vcmask 1045509
        %v410 = vsel %vm409, %v392, %v408
        %vm411 = vcmask 1046534
        %v412 = vsel %vm411, %v396, %v410
        %vm413 = vcmask 1047559
        %v414 = vsel %vm413, %v400, %v412
        %vm415 = vcmask 64512
        %v416 = vsel %vm415, %v414, 0
        %418 = vmatprep.subr.mxu0 0.0
        %419 = vmatpush1.msra.mxu0 %v351
        %420 = vmatprep.subr.mxu0 0.0
        %421 = vmatpush1.msra.mxu0 0.0
        %422 = vmatprep.subr.mxu0 0.0
        %423 = vmatpush1.msra.mxu0 0.0
        %424 = vmatprep.subr.mxu0 0.0
        %425 = vmatpush1.msra.mxu0 0.0
        %426 = vmatprep.subr.mxu0 0.0
        %427 = vmatpush1.msra.mxu0 0.0
        %428 = vmatprep.subr.mxu0 0.0
        %429 = vmatpush1.msra.mxu0 0.0
        %430 = vmatprep.subr.mxu0 0.0
        %431 = vmatpush1.msra.mxu0 0.0
        %432 = vmatprep.subr.mxu0 0.0
        %433 = vmatpush1.msra.mxu0 0.0
        %434 = vmatprep.subr.mxu0 0.0
        %435 = vmatpush1.msra.mxu0 0.0
        %436 = vmatprep.subr.mxu0 0.0
        %437 = vmatpush1.msra.mxu0 0.0
        %438 = vmatprep.subr.mxu0 0.0
        %439 = vmatpush1.msra.mxu0 0.0
        %440 = vmatprep.subr.mxu0 0.0
        %441 = vmatpush1.msra.mxu0 0.0
        %442 = vmatprep.subr.mxu0 0.0
        %443 = vmatpush1.msra.mxu0 0.0
        %444 = vmatprep.subr.mxu0 0.0
        %445 = vmatpush1.msra.mxu0 0.0
        %446 = vmatprep.subr.mxu0 0.0
        %447 = vmatpush1.msra.mxu0 0.0
        %448 = vmatprep.subr.mxu0 0.0
        %449 = vmatpush1.msra.mxu0 0.0
        %450 = vmatprep.subr.mxu0 0.0
        %451 = vmatpush1.msra.mxu0 0.0
        %452 = vmatprep.subr.mxu0 0.0
        %453 = vmatpush1.msra.mxu0 0.0
        %454 = vmatprep.subr.mxu0 0.0
        %455 = vmatpush1.msra.mxu0 0.0
        %456 = vmatprep.subr.mxu0 0.0
        %457 = vmatpush1.msra.mxu0 0.0
        %458 = vmatprep.subr.mxu0 0.0
        %459 = vmatpush1.msra.mxu0 0.0
        %460 = vmatprep.subr.mxu0 0.0
        %461 = vmatpush1.msra.mxu0 0.0
        %462 = vmatprep.subr.mxu0 0.0
        %463 = vmatpush1.msra.mxu0 0.0
        %464 = vmatprep.subr.mxu0 0.0
        %465 = vmatpush1.msra.mxu0 0.0
        %466 = vmatprep.subr.mxu0 0.0
        %467 = vmatpush1.msra.mxu0 0.0
        %468 = vmatprep.subr.mxu0 0.0
        %469 = vmatpush1.msra.mxu0 0.0
        %470 = vmatprep.subr.mxu0 0.0
        %471 = vmatpush1.msra.mxu0 0.0
        %472 = vmatprep.subr.mxu0 0.0
        %473 = vmatpush1.msra.mxu0 0.0
        %474 = vmatprep.subr.mxu0 0.0
        %475 = vmatpush1.msra.mxu0 0.0
        %476 = vmatprep.subr.mxu0 0.0
        %477 = vmatpush1.msra.mxu0 0.0
        %478 = vmatprep.subr.mxu0 0.0
        %479 = vmatpush1.msra.mxu0 0.0
        %480 = vmatprep.subr.mxu0 0.0
        %481 = vmatpush1.msra.mxu0 0.0
        %482 = vmatprep.mubr.f32.mxu0 0.0
        %483 = vmatmul.mubr.f32.gmra.mrb[0].mxu0 %v416
        %v484 = vpop.f32.mrb[0].mxu0
        %v485 = vadd.f32 %v357, %v484
        %v486 = vpop.f32.mrb[0].mxu0
        %487 = vdwg.mxu0
        %488 = vst [vmem:[%s202] sm:$0xff] %v485
        %s489 = sand.u32 %s97, 1
        %s490 = scalar_lea.sflag [#allocation4], %s489
        %s491 = sand.u32 %s97, 1
        %s492 = smul.addr %s491, 8
        %s493 = scalar_lea.vmem [#allocation7], %s492
        // Predicated region
        $region41: #{tpu_custom_call.1} parent=31 // pred_check
          %p494 = pneg %p107
        $region42: #{tpu_custom_call.1} parent=31 // pred_check_branch
          %496 = sbr.rel (%p494) target = $region44
        $region43: #{tpu_custom_call.1} parent=31 // pred_region
          %s498 = ssub.s32 128, 128
          %499 = vsyncadd %s490, %s498
          %s500 = smul.addr %s21, 128
          %s501 = scalar_lea.hbm %s3, %s500
          %s503 = sshll.u32 %s493, 4
          %s504 = int_to_ptr.vmem [resolvable:$true] %s503
          %506 = dma.vmem_to_hbm [thread:$0]  %s504, 128, %s501, %s490
        $region44: #{tpu_custom_call.1} parent=31 // pred_fallthru
          _
      $region32: #{tpu_custom_call.1} parent=5 // pred_fallthru
        _
      %p507 = scmp.le.s32.totalorder 2, %s16
      // Predicated region
      $region45: #{tpu_custom_call.1} parent=5 // pred_check
        %p508 = pneg %p507
      $region46: #{tpu_custom_call.1} parent=5 // pred_check_branch
        %510 = sbr.rel (%p508) target = $region48
      $region47: #{tpu_custom_call.1} parent=5 // pred_region
        %s511 = ssub.s32 %s16, 2
        // Predicated region
        $region49: #{tpu_custom_call.1} parent=47 // pred_check
          %p512 = pneg %p113
        $region50: #{tpu_custom_call.1} parent=47 // pred_check_branch
          %514 = sbr.rel (%p512) target = $region52
        $region51: #{tpu_custom_call.1} parent=47 // pred_region
          %s515 = sand.u32 %s98, 1
          %s516 = scalar_lea.sflag [#allocation4], %s515
          %s517 = sand.u32 %s98, 1
          %s518 = smul.addr %s517, 8
          %s519 = scalar_lea.vmem [#allocation7], %s518
          %520 = dma.done %s516, 128
        $region52: #{tpu_custom_call.1} parent=47 // pred_fallthru
          _
      $region48: #{tpu_custom_call.1} parent=5 // pred_fallthru
        _
    $region6: #{tpu_custom_call.1} parent=1 // loop_footer
      %s20 = sadd.s32 1, %s16
    $region7: #{tpu_custom_call.1} parent=1 // loop_footer_branch
      %15 = sbr.rel target = $region3
    $region8: #{tpu_custom_call.1} parent=1 // loop_exit
      _
    %521 = vsyncpa [#allocation3], 1
    %s522 = scalar_lea.sflag [#allocation3], 1
    %523 = vsyncpa %s522, 1
    %524 = vsyncpa [#allocation6], 1
    %525 = vsyncpa [#allocation4], 1
    %s526 = scalar_lea.sflag [#allocation4], 1
    %527 = vsyncpa %s526, 1

</llo_original>
